<compile_context>
chip_gen: v7x
topology: tpu7x:2x2x1
jax: 0.10.0
libtpu: 0.0.40
codegen_flags: <defaults>
</compile_context>

<pallas_src>
import jax
import jax.numpy as jnp
from jax.experimental import pallas as pl
from jax.experimental.pallas import tpu as pltpu


def _choose_block_l(block_b, C, L, itemsize,
                    tile_budget_bytes=16 * 1024 * 1024,
                    max_block_l=1024):
    """Largest lane-aligned L tile keeping streamed buffers inside VMEM budget."""
    # Live VMEM per unit of block_l:
    #   2x double-buffered x tile (native dtype) + f32 sum scratch + native max scratch.
    per_l = block_b * C * (3 * itemsize + 4)
    fit = max(128, (tile_budget_bytes // per_l) // 128 * 128)
    cap = min(fit, max_block_l)
    if L <= cap:
        return L            # single full-extent block (always a legal shape)
    return cap              # multiple of 128; ragged tail handled by masking


def channel_attention(x, w1, w2, *, block_b=None, block_l=None):
    """CBAM ChannelAttention forward.

    x : (B, C, L)   input feature map (NCL).
    w1: (H, C)      fc1 = Conv1d(C, H, 1, bias=False) weight, H = C // ratio.
    w2: (C, H)      fc2 = Conv1d(H, C, 1, bias=False) weight.
    returns (B, C, 1) sigmoid attention, same dtype as x.
    """
    B, C, L = x.shape
    H, C1 = w1.shape
    assert C1 == C and w2.shape == (C, H)

    if block_b is None:
        block_b = B            # for megacore, pass B // 2 (multiple of 8 or == B)
    assert B % block_b == 0

    itemsize = jnp.dtype(x.dtype).itemsize
    if block_l is None:
        block_l = _choose_block_l(block_b, C, L, itemsize)
    if block_l > L:
        block_l = L
    assert block_l == L or block_l % 128 == 0, (
        "block_l must equal L or be a multiple of 128 (lane axis)")

    nb = B // block_b
    nl = pl.cdiv(L, block_l)
    needs_mask = (L % block_l) != 0
    tb, tl = block_b, block_l

    # One-time layout plumbing outside the kernel: no in-kernel transposes.
    w1t = jnp.transpose(w1)    # (C, H)
    w2t = jnp.transpose(w2)    # (H, C)

    def kernel(x_ref, w1t_ref, w2t_ref, o_ref, sum_acc, max_acc, pooled_ref):
        l = pl.program_id(1)

        @pl.when(l == 0)
        def _init():
            sum_acc[...] = jnp.zeros_like(sum_acc)
            max_acc[...] = jnp.full_like(max_acc, -jnp.inf)

        x_tile = x_ref[...]                       # (TB, C, TL), native dtype
        if needs_mask:
            lane = jax.lax.broadcasted_iota(jnp.int32, (1, 1, tl), 2)
            valid = (l * tl + lane) < L
            x_sum = jnp.where(valid, x_tile, jnp.zeros_like(x_tile))
            x_max = jnp.where(valid, x_tile, jnp.full_like(x_tile, -jnp.inf))
        else:
            x_sum = x_tile
            x_max = x_tile

        # Streamed path: pure VPU element-wise accumulation (no per-tile XLU
        # reduce, no eager f32 copy of the whole tile).
        sum_acc[...] = sum_acc[...] + x_sum       # f32 accumulator (promotes)
        max_acc[...] = jnp.maximum(max_acc[...], x_max)

        @pl.when(l == pl.num_programs(1) - 1)
        def _finalize():
            # Single cross-lane reduce per pool, then the tiny shared MLP.
            avg = jnp.sum(sum_acc[...], axis=-1) * (1.0 / L)          # (TB, C) f32
            mxv = jnp.max(max_acc[...], axis=-1).astype(jnp.float32)  # (TB, C) f32
            # Pack avg/max rows into one operand so fc1/fc2 each run once.
            pooled_ref[:tb, :] = avg
            pooled_ref[tb:, :] = mxv
            pooled = pooled_ref[...]                                  # (2*TB, C)
            w1t_v = w1t_ref[...].astype(jnp.float32)                  # (C, H)
            w2t_v = w2t_ref[...].astype(jnp.float32)                  # (H, C)
            h = jnp.maximum(
                jnp.dot(pooled, w1t_v, preferred_element_type=jnp.float32), 0.0)
            y = jnp.dot(h, w2t_v, preferred_element_type=jnp.float32)  # (2*TB, C)
            out = jax.nn.sigmoid(y[:tb] + y[tb:])                      # (TB, C)
            o_ref[...] = out.astype(o_ref.dtype)

    out2d = pl.pallas_call(
        kernel,
        out_shape=jax.ShapeDtypeStruct((B, C), x.dtype),
        grid_spec=pltpu.PrefetchScalarGridSpec(
            num_scalar_prefetch=0,
            grid=(nb, nl),
            in_specs=[
                pl.BlockSpec((tb, C, tl), lambda b, l: (b, 0, l)),
                pl.BlockSpec((C, H), lambda b, l: (0, 0)),   # resident weight
                pl.BlockSpec((H, C), lambda b, l: (0, 0)),   # resident weight
            ],
            out_specs=pl.BlockSpec((tb, C), lambda b, l: (b, 0)),
            scratch_shapes=[
                pltpu.VMEM((tb, C, tl), jnp.float32),   # running sum (f32)
                pltpu.VMEM((tb, C, tl), x.dtype),       # running max (native)
                pltpu.VMEM((2 * tb, C), jnp.float32),   # packed pooled rows
            ],
        ),
        compiler_params=pltpu.CompilerParams(
            dimension_semantics=("parallel", "arbitrary"),
            vmem_limit_bytes=32 * 1024 * 1024,
        ),
    )(x, w1t, w2t)

    return out2d[..., None]    # (B, C, 1); lane-dense store happened in-kernel


if __name__ == "__main__":
    # in_planes = 32, ratio = 8 -> hidden = 4 (consistent with the module).
    B, C = 2, 32
    ratio = 8
    H = C // ratio

    key = jax.random.PRNGKey(0)
    kx1, kx2, k1, k2 = jax.random.split(key, 4)

    # Conv1d kernel_size=1, bias=False weights: fc1 (H, C, 1) -> (H, C),
    # fc2 (C, H, 1) -> (C, H).
    w1 = jax.random.normal(k1, (H, C), dtype=jnp.float32) * 0.1
    w2 = jax.random.normal(k2, (C, H), dtype=jnp.float32) * 0.1

    def reference(x):
        avg = jnp.mean(x, axis=-1)
        mxv = jnp.max(x, axis=-1)
        return jax.nn.sigmoid(
            jnp.maximum(avg @ w1.T, 0.0) @ w2.T
            + jnp.maximum(mxv @ w1.T, 0.0) @ w2.T
        )[..., None]

    # Test 1: small input, single full-L block.
    L1 = 16
    x1 = jax.random.normal(kx1, (B, C, L1), dtype=jnp.float32)
    out1 = jax.block_until_ready(channel_attention(x1, w1, w2))
    assert out1.shape == (B, C, 1)
    assert jnp.allclose(out1, reference(x1), atol=1e-5, rtol=1e-5)

    # Test 2: L tiled over a grid with a ragged last tile (exercises the
    # accumulator / mask / finalize path; 320 = 2*128 + 64).
    L2 = 320
    x2 = jax.random.normal(kx2, (B, C, L2), dtype=jnp.float32)
    out2 = jax.block_until_ready(channel_attention(x2, w1, w2, block_l=128))
    assert out2.shape == (B, C, 1)
    assert jnp.allclose(out2, reference(x2), atol=1e-5, rtol=1e-5)

    print("KERNEL_OK")
</pallas_src>

<mosaic_0001>
module attributes {stable_mosaic.version = 11 : i64} {
  func.func @kernel(%arg0: i32, %arg1: i32, %arg2: memref<2x32x16xf32, #tpu.memory_space<vmem>>, %arg3: memref<32x4xf32, #tpu.memory_space<vmem>>, %arg4: memref<4x32xf32, #tpu.memory_space<vmem>>, %arg5: memref<2x32xf32, #tpu.memory_space<vmem>>, %arg6: memref<2x32x16xf32, #tpu.memory_space<vmem>>, %arg7: memref<2x32x16xf32, #tpu.memory_space<vmem>>, %arg8: memref<4x32xf32, #tpu.memory_space<vmem>>) attributes {dimension_semantics = [#tpu.dimension_semantics<parallel>, #tpu.dimension_semantics<arbitrary>], iteration_bounds = array<i64: 1, 1>, scalar_prefetch = 0 : i64, scratch_operands = 3 : i64, tpu.core_type = #tpu.core_type<tc>, window_params = [{transform_indices = @transform_0, window_bounds = array<i64: 2, 32, 16>}, {pipeline_mode = #tpu.pipeline_mode<synchronous>, transform_indices = @transform_1, window_bounds = array<i64: 32, 4>}, {pipeline_mode = #tpu.pipeline_mode<synchronous>, transform_indices = @transform_2, window_bounds = array<i64: 4, 32>}, {transform_indices = @transform_3, window_bounds = array<i64: 2, 32>}]} {
    %c0_i32 = arith.constant 0 : i32
    %0 = arith.cmpi eq, %arg1, %c0_i32 : i32
    %1 = arith.extui %0 : i1 to i32
    %c0_i32_0 = arith.constant 0 : i32
    %2 = arith.cmpi ne, %1, %c0_i32_0 : i32
    scf.if %2 {
      %cst = arith.constant 0.000000e+00 : f32
      %13 = vector.broadcast %cst : f32 to vector<2x32x16xf32>
      %c0_17 = arith.constant 0 : index
      %c0_18 = arith.constant 0 : index
      %c0_19 = arith.constant 0 : index
      %14 = vector.load %arg6[%c0_17, %c0_18, %c0_19] : memref<2x32x16xf32, #tpu.memory_space<vmem>>, vector<2x32x16xf32>
      tpu.vector_store %arg6[%c0_17, %c0_18, %c0_19], %13 {strides = array<i32>} : memref<2x32x16xf32, #tpu.memory_space<vmem>>, vector<2x32x16xf32>,
      %cst_20 = arith.constant 0xFF800000 : f32
      %15 = vector.broadcast %cst_20 : f32 to vector<2x32x16xf32>
      %c0_21 = arith.constant 0 : index
      %c0_22 = arith.constant 0 : index
      %c0_23 = arith.constant 0 : index
      %16 = vector.load %arg7[%c0_21, %c0_22, %c0_23] : memref<2x32x16xf32, #tpu.memory_space<vmem>>, vector<2x32x16xf32>
      tpu.vector_store %arg7[%c0_21, %c0_22, %c0_23], %15 {strides = array<i32>} : memref<2x32x16xf32, #tpu.memory_space<vmem>>, vector<2x32x16xf32>,
    } else {
    }
    %c0 = arith.constant 0 : index
    %c0_1 = arith.constant 0 : index
    %c0_2 = arith.constant 0 : index
    %3 = vector.load %arg2[%c0, %c0_1, %c0_2] : memref<2x32x16xf32, #tpu.memory_space<vmem>>, vector<2x32x16xf32>
    %c0_3 = arith.constant 0 : index
    %c0_4 = arith.constant 0 : index
    %c0_5 = arith.constant 0 : index
    %4 = vector.load %arg6[%c0_3, %c0_4, %c0_5] : memref<2x32x16xf32, #tpu.memory_space<vmem>>, vector<2x32x16xf32>
    %5 = arith.addf %4, %3 : vector<2x32x16xf32>
    %c0_6 = arith.constant 0 : index
    %c0_7 = arith.constant 0 : index
    %c0_8 = arith.constant 0 : index
    %6 = vector.load %arg6[%c0_6, %c0_7, %c0_8] : memref<2x32x16xf32, #tpu.memory_space<vmem>>, vector<2x32x16xf32>
    tpu.vector_store %arg6[%c0_6, %c0_7, %c0_8], %5 {strides = array<i32>} : memref<2x32x16xf32, #tpu.memory_space<vmem>>, vector<2x32x16xf32>,
    %c0_9 = arith.constant 0 : index
    %c0_10 = arith.constant 0 : index
    %c0_11 = arith.constant 0 : index
    %7 = vector.load %arg7[%c0_9, %c0_10, %c0_11] : memref<2x32x16xf32, #tpu.memory_space<vmem>>, vector<2x32x16xf32>
    %8 = arith.maximumf %7, %3 : vector<2x32x16xf32>
    %c0_12 = arith.constant 0 : index
    %c0_13 = arith.constant 0 : index
    %c0_14 = arith.constant 0 : index
    %9 = vector.load %arg7[%c0_12, %c0_13, %c0_14] : memref<2x32x16xf32, #tpu.memory_space<vmem>>, vector<2x32x16xf32>
    tpu.vector_store %arg7[%c0_12, %c0_13, %c0_14], %8 {strides = array<i32>} : memref<2x32x16xf32, #tpu.memory_space<vmem>>, vector<2x32x16xf32>,
    %c0_i32_15 = arith.constant 0 : i32
    %10 = arith.cmpi eq, %arg1, %c0_i32_15 : i32
    %11 = arith.extui %10 : i1 to i32
    %c0_i32_16 = arith.constant 0 : i32
    %12 = arith.cmpi ne, %11, %c0_i32_16 : i32
    scf.if %12 {
      %c0_17 = arith.constant 0 : index
      %c0_18 = arith.constant 0 : index
      %c0_19 = arith.constant 0 : index
      %13 = vector.load %arg6[%c0_17, %c0_18, %c0_19] : memref<2x32x16xf32, #tpu.memory_space<vmem>>, vector<2x32x16xf32>
      %cst = arith.constant dense<0.000000e+00> : vector<2x32xf32>
      %14 = vector.multi_reduction <add>, %13, %cst [2] : vector<2x32x16xf32> to vector<2x32xf32>
      %cst_20 = arith.constant 6.250000e-02 : f32
      %15 = vector.broadcast %cst_20 : f32 to vector<2x32xf32>
      %16 = arith.mulf %14, %15 : vector<2x32xf32>
      %c0_21 = arith.constant 0 : index
      %c0_22 = arith.constant 0 : index
      %c0_23 = arith.constant 0 : index
      %17 = vector.load %arg7[%c0_21, %c0_22, %c0_23] : memref<2x32x16xf32, #tpu.memory_space<vmem>>, vector<2x32x16xf32>
      %cst_24 = arith.constant dense<0xFF800000> : vector<2x32xf32>
      %18 = vector.multi_reduction <maximumf>, %17, %cst_24 [2] : vector<2x32x16xf32> to vector<2x32xf32>
      %c0_25 = arith.constant 0 : index
      %c0_26 = arith.constant 0 : index
      %19 = vector.load %arg8[%c0_25, %c0_26] : memref<4x32xf32, #tpu.memory_space<vmem>>, vector<2x32xf32>
      tpu.vector_store %arg8[%c0_25, %c0_26], %16 {strides = array<i32>} : memref<4x32xf32, #tpu.memory_space<vmem>>, vector<2x32xf32>,
      %c2 = arith.constant 2 : index
      %c0_27 = arith.constant 0 : index
      %20 = vector.load %arg8[%c2, %c0_27] : memref<4x32xf32, #tpu.memory_space<vmem>>, vector<2x32xf32>
      tpu.vector_store %arg8[%c2, %c0_27], %18 {strides = array<i32>} : memref<4x32xf32, #tpu.memory_space<vmem>>, vector<2x32xf32>,
      %c0_28 = arith.constant 0 : index
      %c0_29 = arith.constant 0 : index
      %21 = vector.load %arg8[%c0_28, %c0_29] : memref<4x32xf32, #tpu.memory_space<vmem>>, vector<4x32xf32>
      %c0_30 = arith.constant 0 : index
      %c0_31 = arith.constant 0 : index
      %22 = vector.load %arg3[%c0_30, %c0_31] : memref<32x4xf32, #tpu.memory_space<vmem>>, vector<32x4xf32>
      %c0_32 = arith.constant 0 : index
      %c0_33 = arith.constant 0 : index
      %23 = vector.load %arg4[%c0_32, %c0_33] : memref<4x32xf32, #tpu.memory_space<vmem>>, vector<4x32xf32>
      %cst_34 = arith.constant dense<0.000000e+00> : vector<4x4xf32>
      %24 = tpu.matmul %21, %22, %cst_34 {dimension_numbers = #tpu.dot_dimension_numbers<[1], [0], [0], [1], [0, 0, 1, 1], [], []>} : vector<4x32xf32>, vector<32x4xf32>, vector<4x4xf32> -> vector<4x4xf32>
      %cst_35 = arith.constant 0.000000e+00 : f32
      %25 = vector.broadcast %cst_35 : f32 to vector<4x4xf32>
      %26 = arith.maximumf %24, %25 : vector<4x4xf32>
      %cst_36 = arith.constant dense<0.000000e+00> : vector<4x32xf32>
      %27 = tpu.matmul %26, %23, %cst_36 {dimension_numbers = #tpu.dot_dimension_numbers<[1], [0], [0], [1], [0, 0, 1, 1], [], []>} : vector<4x4xf32>, vector<4x32xf32>, vector<4x32xf32> -> vector<4x32xf32>
      %28 = vector.extract_strided_slice %27 {offsets = [0, 0], sizes = [2, 32], strides = [1, 1]} : vector<4x32xf32> to vector<2x32xf32>
      %29 = vector.extract_strided_slice %27 {offsets = [2, 0], sizes = [2, 32], strides = [1, 1]} : vector<4x32xf32> to vector<2x32xf32>
      %30 = arith.addf %28, %29 : vector<2x32xf32>
      %31 = arith.negf %30 : vector<2x32xf32>
      %32 = math.exp %31 : vector<2x32xf32>
      %cst_37 = arith.constant 1.000000e+00 : f32
      %33 = vector.broadcast %cst_37 : f32 to vector<2x32xf32>
      %34 = arith.addf %33, %32 : vector<2x32xf32>
      %35 = arith.divf %33, %34 : vector<2x32xf32>
      %c0_38 = arith.constant 0 : index
      %c0_39 = arith.constant 0 : index
      %36 = vector.load %arg5[%c0_38, %c0_39] : memref<2x32xf32, #tpu.memory_space<vmem>>, vector<2x32xf32>
      tpu.vector_store %arg5[%c0_38, %c0_39], %35 {strides = array<i32>} : memref<2x32xf32, #tpu.memory_space<vmem>>, vector<2x32xf32>,
    } else {
    }
    return
  }
  func.func @transform_0(%arg0: i32, %arg1: i32) -> (i32, i32, i32) {
    %c0_i32 = arith.constant 0 : i32
    %c0_i32_0 = arith.constant 0 : i32
    return %arg0, %c0_i32, %arg1 : i32, i32, i32
  }
  func.func @transform_1(%arg0: i32, %arg1: i32) -> (i32, i32) {
    %c0_i32 = arith.constant 0 : i32
    %c0_i32_0 = arith.constant 0 : i32
    %c0_i32_1 = arith.constant 0 : i32
    return %c0_i32, %c0_i32_0 : i32, i32
  }
  func.func @transform_2(%arg0: i32, %arg1: i32) -> (i32, i32) {
    %c0_i32 = arith.constant 0 : i32
    %c0_i32_0 = arith.constant 0 : i32
    %c0_i32_1 = arith.constant 0 : i32
    return %c0_i32, %c0_i32_0 : i32, i32
  }
  func.func @transform_3(%arg0: i32, %arg1: i32) -> (i32, i32) {
    %c0_i32 = arith.constant 0 : i32
    %c0_i32_0 = arith.constant 0 : i32
    return %arg0, %c0_i32 : i32, i32
  }
}

</mosaic_0001>

<llo_original>
// kernel: tpu_custom_call.1
$region0: #{tpu_custom_call.1}
  #allocation0 [shape = 'u32[]', space=smem, size = 0x4, offset = 0x4, fixed_abs, tag = 'smem constant byte address 0x4 - core index']
  #allocation1 [shape = 'u32[144,128]{1,0:T(1,128)}', space=vmem, size = 0x12000, scoped, tag = 'internal scratch']
  #allocation2 [shape = 'f32[2,32,16]{2,1,0:T(8,128)}', space=vmem, size = 0x8000, scoped, tag = 'scratch operand']
  #allocation3 [shape = 'f32[2,32,16]{2,1,0:T(8,128)}', space=vmem, size = 0x8000, scoped, tag = 'scratch operand']
  #allocation4 [shape = 'f32[4,32]{1,0:T(4,128)}', space=vmem, size = 0x800, scoped, tag = 'scratch operand']
  %s0 = inlined_call_operand.vmem [shape: f32[2,32,16], index: 0, kind: input, shape index: {}]
  %s1 = inlined_call_operand.vmem [shape: f32[32,4], index: 1, kind: input, shape index: {}]
  %s2 = inlined_call_operand.vmem [shape: f32[4,32], index: 2, kind: input, shape index: {}]
  %s3 = inlined_call_operand.hbm [shape: f32[2,32], index: 3, kind: output, shape index: {}]
  %s4 = sld [smem:[#allocation0]]
  $region30: #{tpu_custom_call.1} parent=0
    _
  %s6 = ssub.s32 1, %s4
  %s7 = scalar_select 0, %s6, %s4
  $region1: #{tpu_custom_call.1} parent=0
    #allocation5 [shape = 'u8[1024]{0}', space=vmem, size = 0x400, scoped, tag = 'output window, operand 0, single buffered']
    #allocation6 [shape = 's32[1]{0}', space=sflag, size = 0x4, scoped, tag = 'scoped memory for tpu_custom_call.1']
    %8 = vsyncpa [#allocation6], 0
    // Predicated region
    $region2: #{tpu_custom_call.1} parent=1 // pred_check
      _
    $region3: #{tpu_custom_call.1} parent=1 // pred_check_branch
      %10 = sbr.rel (0) target = $region5
    $region4: #{tpu_custom_call.1} parent=1 // pred_region
      _
    $region5: #{tpu_custom_call.1} parent=1 // pred_fallthru
      _
    // Predicated region
    $region6: #{tpu_custom_call.1} parent=1 // pred_check
      _
    $region7: #{tpu_custom_call.1} parent=1 // pred_check_branch
      %12 = sbr.rel (0) target = $region9
    $region8: #{tpu_custom_call.1} parent=1 // pred_region
      _
    $region9: #{tpu_custom_call.1} parent=1 // pred_fallthru
      _
    // Predicated region
    $region10: #{tpu_custom_call.1} parent=1 // pred_check
      _
    $region11: #{tpu_custom_call.1} parent=1 // pred_check_branch
      %14 = sbr.rel (0) target = $region13
    $region12: #{tpu_custom_call.1} parent=1 // pred_region
      _
    $region13: #{tpu_custom_call.1} parent=1 // pred_fallthru
      _
    %p15 = scmp.eq.s32.totalorder 0, 0
    // Predicated region
    $region14: #{tpu_custom_call.1} parent=1 // pred_check
      %p16 = pneg %p15
    $region15: #{tpu_custom_call.1} parent=1 // pred_check_branch
      %18 = sbr.rel (%p16) target = $region17
    $region16: #{tpu_custom_call.1} parent=1 // pred_region
      %vm19 = vcmask 130048
      %20 = vst.msk [vmem:[#allocation2] sm:$0xff] %vm19, 0.0
      %21 = vst.msk [vmem:[#allocation2 + $0x8] sm:$0xff] %vm19, 0.0
      %22 = vst.msk [vmem:[#allocation2 + $0x10] sm:$0xff] %vm19, 0.0
      %23 = vst.msk [vmem:[#allocation2 + $0x18] sm:$0xff] %vm19, 0.0
      %24 = vst.msk [vmem:[#allocation2 + $0x20] sm:$0xff] %vm19, 0.0
      %25 = vst.msk [vmem:[#allocation2 + $0x28] sm:$0xff] %vm19, 0.0
      %26 = vst.msk [vmem:[#allocation2 + $0x30] sm:$0xff] %vm19, 0.0
      %27 = vst.msk [vmem:[#allocation2 + $0x38] sm:$0xff] %vm19, 0.0
      %28 = vst.msk [vmem:[#allocation3] sm:$0xff] %vm19, -inf
      %29 = vst.msk [vmem:[#allocation3 + $0x8] sm:$0xff] %vm19, -inf
      %30 = vst.msk [vmem:[#allocation3 + $0x10] sm:$0xff] %vm19, -inf
      %31 = vst.msk [vmem:[#allocation3 + $0x18] sm:$0xff] %vm19, -inf
      %32 = vst.msk [vmem:[#allocation3 + $0x20] sm:$0xff] %vm19, -inf
      %33 = vst.msk [vmem:[#allocation3 + $0x28] sm:$0xff] %vm19, -inf
      %34 = vst.msk [vmem:[#allocation3 + $0x30] sm:$0xff] %vm19, -inf
      %35 = vst.msk [vmem:[#allocation3 + $0x38] sm:$0xff] %vm19, -inf
    $region17: #{tpu_custom_call.1} parent=1 // pred_fallthru
      _
    %v36 = vld [vmem:[%s0] sm:$0xff]
    %v37 = vld [vmem:[%s0 + $0x8] sm:$0xff]
    %v38 = vld [vmem:[%s0 + $0x10] sm:$0xff]
    %v39 = vld [vmem:[%s0 + $0x18] sm:$0xff]
    %v40 = vld [vmem:[%s0 + $0x20] sm:$0xff]
    %v41 = vld [vmem:[%s0 + $0x28] sm:$0xff]
    %v42 = vld [vmem:[%s0 + $0x30] sm:$0xff]
    %v43 = vld [vmem:[%s0 + $0x38] sm:$0xff]
    %v44 = vld [vmem:[#allocation2] sm:$0xff]
    %v45 = vld [vmem:[#allocation2 + $0x8] sm:$0xff]
    %v46 = vld [vmem:[#allocation2 + $0x10] sm:$0xff]
    %v47 = vld [vmem:[#allocation2 + $0x18] sm:$0xff]
    %v48 = vld [vmem:[#allocation2 + $0x20] sm:$0xff]
    %v49 = vld [vmem:[#allocation2 + $0x28] sm:$0xff]
    %v50 = vld [vmem:[#allocation2 + $0x30] sm:$0xff]
    %v51 = vld [vmem:[#allocation2 + $0x38] sm:$0xff]
    %v52 = vadd.f32 %v44, %v36
    %v53 = vadd.f32 %v45, %v37
    %v54 = vadd.f32 %v46, %v38
    %v55 = vadd.f32 %v47, %v39
    %v56 = vadd.f32 %v48, %v40
    %v57 = vadd.f32 %v49, %v41
    %v58 = vadd.f32 %v50, %v42
    %v59 = vadd.f32 %v51, %v43
    %vm60 = vcmask 130048
    %61 = vst.msk [vmem:[#allocation2] sm:$0xff] %vm60, %v52
    %62 = vst.msk [vmem:[#allocation2 + $0x8] sm:$0xff] %vm60, %v53
    %63 = vst.msk [vmem:[#allocation2 + $0x10] sm:$0xff] %vm60, %v54
    %64 = vst.msk [vmem:[#allocation2 + $0x18] sm:$0xff] %vm60, %v55
    %65 = vst.msk [vmem:[#allocation2 + $0x20] sm:$0xff] %vm60, %v56
    %66 = vst.msk [vmem:[#allocation2 + $0x28] sm:$0xff] %vm60, %v57
    %67 = vst.msk [vmem:[#allocation2 + $0x30] sm:$0xff] %vm60, %v58
    %68 = vst.msk [vmem:[#allocation2 + $0x38] sm:$0xff] %vm60, %v59
    %v69 = vld [vmem:[#allocation3] sm:$0xff]
    %v70 = vld [vmem:[#allocation3 + $0x8] sm:$0xff]
    %v71 = vld [vmem:[#allocation3 + $0x10] sm:$0xff]
    %v72 = vld [vmem:[#allocation3 + $0x18] sm:$0xff]
    %v73 = vld [vmem:[#allocation3 + $0x20] sm:$0xff]
    %v74 = vld [vmem:[#allocation3 + $0x28] sm:$0xff]
    %v75 = vld [vmem:[#allocation3 + $0x30] sm:$0xff]
    %v76 = vld [vmem:[#allocation3 + $0x38] sm:$0xff]
    %v77 = vmax.f32 %v69, %v36
    %v78 = vmax.f32 %v70, %v37
    %v79 = vmax.f32 %v71, %v38
    %v80 = vmax.f32 %v72, %v39
    %v81 = vmax.f32 %v73, %v40
    %v82 = vmax.f32 %v74, %v41
    %v83 = vmax.f32 %v75, %v42
    %v84 = vmax.f32 %v76, %v43
    %85 = vst.msk [vmem:[#allocation3] sm:$0xff] %vm60, %v77
    %86 = vst.msk [vmem:[#allocation3 + $0x8] sm:$0xff] %vm60, %v78
    %87 = vst.msk [vmem:[#allocation3 + $0x10] sm:$0xff] %vm60, %v79
    %88 = vst.msk [vmem:[#allocation3 + $0x18] sm:$0xff] %vm60, %v80
    %89 = vst.msk [vmem:[#allocation3 + $0x20] sm:$0xff] %vm60, %v81
    %90 = vst.msk [vmem:[#allocation3 + $0x28] sm:$0xff] %vm60, %v82
    %91 = vst.msk [vmem:[#allocation3 + $0x30] sm:$0xff] %vm60, %v83
    %92 = vst.msk [vmem:[#allocation3 + $0x38] sm:$0xff] %vm60, %v84
    // Predicated region
    $region18: #{tpu_custom_call.1} parent=1 // pred_check
      %p93 = pneg %p15
    $region19: #{tpu_custom_call.1} parent=1 // pred_check_branch
      %95 = sbr.rel (%p93) target = $region21
    $region20: #{tpu_custom_call.1} parent=1 // pred_region
      %v96 = vld [vmem:[#allocation2] sm:$0xff]
      %v97 = vld [vmem:[#allocation2 + $0x8] sm:$0xff]
      %v98 = vld [vmem:[#allocation2 + $0x10] sm:$0xff]
      %v99 = vld [vmem:[#allocation2 + $0x18] sm:$0xff]
      %v100 = vld [vmem:[#allocation2 + $0x20] sm:$0xff]
      %v101 = vld [vmem:[#allocation2 + $0x28] sm:$0xff]
      %v102 = vld [vmem:[#allocation2 + $0x30] sm:$0xff]
      %v103 = vld [vmem:[#allocation2 + $0x38] sm:$0xff]
      %v104 = vsel %vm60, %v96, 0.0
      %105 = vadd.xlane.f32.xlu0 %v104
      %v106 = vpop.xlane.xlu0 %105
      %v107 = vsel %vm60, %v97, 0.0
      %108 = vadd.xlane.f32.xlu0 %v107
      %v109 = vpop.xlane.xlu0 %108
      %v110 = vsel %vm60, %v98, 0.0
      %111 = vadd.xlane.f32.xlu0 %v110
      %v112 = vpop.xlane.xlu0 %111
      %v113 = vsel %vm60, %v99, 0.0
      %114 = vadd.xlane.f32.xlu0 %v113
      %v115 = vpop.xlane.xlu0 %114
      %v116 = vsel %vm60, %v100, 0.0
      %117 = vadd.xlane.f32.xlu0 %v116
      %v118 = vpop.xlane.xlu0 %117
      %v119 = vsel %vm60, %v101, 0.0
      %120 = vadd.xlane.f32.xlu0 %v119
      %v121 = vpop.xlane.xlu0 %120
      %v122 = vsel %vm60, %v102, 0.0
      %123 = vadd.xlane.f32.xlu0 %v122
      %v124 = vpop.xlane.xlu0 %123
      %v125 = vsel %vm60, %v103, 0.0
      %126 = vadd.xlane.f32.xlu0 %v125
      %v127 = vpop.xlane.xlu0 %126
      %v128 = vmul.f32 %v106, 0.0625
      %v129 = vmul.f32 %v109, 0.0625
      %v130 = vmul.f32 %v112, 0.0625
      %v131 = vmul.f32 %v115, 0.0625
      %v132 = vmul.f32 %v118, 0.0625
      %v133 = vmul.f32 %v121, 0.0625
      %v134 = vmul.f32 %v124, 0.0625
      %v135 = vmul.f32 %v127, 0.0625
      %v136 = vld [vmem:[#allocation3] sm:$0xff]
      %v137 = vld [vmem:[#allocation3 + $0x8] sm:$0xff]
      %v138 = vld [vmem:[#allocation3 + $0x10] sm:$0xff]
      %v139 = vld [vmem:[#allocation3 + $0x18] sm:$0xff]
      %v140 = vld [vmem:[#allocation3 + $0x20] sm:$0xff]
      %v141 = vld [vmem:[#allocation3 + $0x28] sm:$0xff]
      %v142 = vld [vmem:[#allocation3 + $0x30] sm:$0xff]
      %v143 = vld [vmem:[#allocation3 + $0x38] sm:$0xff]
      %v144 = vsel %vm60, %v136, -inf
      %145 = vmax.xlane.f32.xlu0 %v144
      %v146 = vpop.xlane.xlu0 %145
      %v147 = vsel %vm60, %v137, -inf
      %148 = vmax.xlane.f32.xlu0 %v147
      %v149 = vpop.xlane.xlu0 %148
      %v150 = vsel %vm60, %v138, -inf
      %151 = vmax.xlane.f32.xlu0 %v150
      %v152 = vpop.xlane.xlu0 %151
      %v153 = vsel %vm60, %v139, -inf
      %154 = vmax.xlane.f32.xlu0 %v153
      %v155 = vpop.xlane.xlu0 %154
      %v156 = vsel %vm60, %v140, -inf
      %157 = vmax.xlane.f32.xlu0 %v156
      %v158 = vpop.xlane.xlu0 %157
      %v159 = vsel %vm60, %v141, -inf
      %160 = vmax.xlane.f32.xlu0 %v159
      %v161 = vpop.xlane.xlu0 %160
      %v162 = vsel %vm60, %v142, -inf
      %163 = vmax.xlane.f32.xlu0 %v162
      %v164 = vpop.xlane.xlu0 %163
      %v165 = vsel %vm60, %v143, -inf
      %166 = vmax.xlane.f32.xlu0 %v165
      %v167 = vpop.xlane.xlu0 %166
      %v176 = vlaneseq
      %v177 = vand.u32 %v176, 127
      %v178 = vlaneseq
      %v179 = vshrl.u32 %v178, 7
      %v180 = vsub.s32 %v177, %v179
      %v181 = vrot.slane %v128, %v180
      %v182 = vadd.s32 %v177, 4294967288
      %v183 = vlaneseq
      %v184 = vshrl.u32 %v183, 7
      %v185 = vsub.s32 %v182, %v184
      %v186 = vrot.slane %v129, %v185
      %vm187 = vcmask 130112
      %v188 = vsel %vm187, %v186, %v181
      %v189 = vadd.s32 %v177, 4294967280
      %v190 = vlaneseq
      %v191 = vshrl.u32 %v190, 7
      %v192 = vsub.s32 %v189, %v191
      %v193 = vrot.slane %v130, %v192
      %vm194 = vcmask 195712
      %v195 = vsel %vm194, %v193, %v188
      %v196 = vadd.s32 %v177, 4294967272
      %v197 = vlaneseq
      %v198 = vshrl.u32 %v197, 7
      %v199 = vsub.s32 %v196, %v198
      %v200 = vrot.slane %v131, %v199
      %vm201 = vcmask 261312
      %v202 = vsel %vm201, %v200, %v195
      %v203 = vlaneseq
      %v204 = vshrl.u32 %v203, 7
      %v205 = vsub.s32 %v177, %v204
      %v206 = vrot.slane %v132, %v205
      %v207 = vlaneseq
      %v208 = vshrl.u32 %v207, 7
      %v209 = vsub.s32 %v182, %v208
      %v210 = vrot.slane %v133, %v209
      %v211 = vsel %vm187, %v210, %v206
      %v212 = vlaneseq
      %v213 = vshrl.u32 %v212, 7
      %v214 = vsub.s32 %v189, %v213
      %v215 = vrot.slane %v134, %v214
      %v216 = vsel %vm194, %v215, %v211
      %v217 = vlaneseq
      %v218 = vshrl.u32 %v217, 7
      %v219 = vsub.s32 %v196, %v218
      %v220 = vrot.slane %v135, %v219
      %v221 = vsel %vm201, %v220, %v216
      %vm222 = vcmask 1041409
      %v223 = vsel %vm222, %v221, %v202
      %vm225 = vcmask 254976
      %226 = vst.msk [vmem:[#allocation4] sm:$0x3] %vm225, %v223
      %v235 = vlaneseq
      %v236 = vshrl.u32 %v235, 7
      %v237 = vsub.s32 %v177, %v236
      %v238 = vrot.slane %v146, %v237
      %v239 = vlaneseq
      %v240 = vshrl.u32 %v239, 7
      %v241 = vsub.s32 %v182, %v240
      %v242 = vrot.slane %v149, %v241
      %v243 = vsel %vm187, %v242, %v238
      %v244 = vlaneseq
      %v245 = vshrl.u32 %v244, 7
      %v246 = vsub.s32 %v189, %v245
      %v247 = vrot.slane %v152, %v246
      %v248 = vsel %vm194, %v247, %v243
      %v249 = vlaneseq
      %v250 = vshrl.u32 %v249, 7
      %v251 = vsub.s32 %v196, %v250
      %v252 = vrot.slane %v155, %v251
      %v253 = vsel %vm201, %v252, %v248
      %v254 = vlaneseq
      %v255 = vshrl.u32 %v254, 7
      %v256 = vsub.s32 %v177, %v255
      %v257 = vrot.slane %v158, %v256
      %v258 = vlaneseq
      %v259 = vshrl.u32 %v258, 7
      %v260 = vsub.s32 %v182, %v259
      %v261 = vrot.slane %v161, %v260
      %v262 = vsel %vm187, %v261, %v257
      %v263 = vlaneseq
      %v264 = vshrl.u32 %v263, 7
      %v265 = vsub.s32 %v189, %v264
      %v266 = vrot.slane %v164, %v265
      %v267 = vsel %vm194, %v266, %v262
      %v268 = vlaneseq
      %v269 = vshrl.u32 %v268, 7
      %v270 = vsub.s32 %v196, %v269
      %v271 = vrot.slane %v167, %v270
      %v272 = vsel %vm201, %v271, %v267
      %v273 = vsel %vm222, %v272, %v253
      %275 = vst.msk [vmem:[#allocation4 + $0x2] sm:$0x3] %vm225, %v273
      %v276 = vld [vmem:[#allocation4] sm:$0xf]
      %v277 = vld [vmem:[%s1] sm:$0xff]
      %v278 = vld [vmem:[%s1 + $0x8] sm:$0xff]
      %v279 = vld [vmem:[%s1 + $0x10] sm:$0xff]
      %v280 = vld [vmem:[%s1 + $0x18] sm:$0xff]
      %v281 = vld [vmem:[%s2] sm:$0xf]
      %vm282 = vcmask 261120
      %v284 = vsel %vm282, %v276, 0
      %286 = vmatprep.subr.mxu0 0.0
      %287 = vmatpush1.msra.mxu0 %v277
      %288 = vmatprep.subr.mxu0 0.0
      %289 = vmatpush1.msra.mxu0 %v278
      %290 = vmatprep.subr.mxu0 0.0
      %291 = vmatpush1.msra.mxu0 %v279
      %292 = vmatprep.subr.mxu0 0.0
      %293 = vmatpush1.msra.mxu0 %v280
      %294 = vmatprep.subr.mxu0 0.0
      %295 = vmatpush1.msra.mxu0 0.0
      %296 = vmatprep.subr.mxu0 0.0
      %297 = vmatpush1.msra.mxu0 0.0
      %298 = vmatprep.subr.mxu0 0.0
      %299 = vmatpush1.msra.mxu0 0.0
      %300 = vmatprep.subr.mxu0 0.0
      %301 = vmatpush1.msra.mxu0 0.0
      %302 = vmatprep.subr.mxu0 0.0
      %303 = vmatpush1.msra.mxu0 0.0
      %304 = vmatprep.subr.mxu0 0.0
      %305 = vmatpush1.msra.mxu0 0.0
      %306 = vmatprep.subr.mxu0 0.0
      %307 = vmatpush1.msra.mxu0 0.0
      %308 = vmatprep.subr.mxu0 0.0
      %309 = vmatpush1.msra.mxu0 0.0
      %310 = vmatprep.subr.mxu0 0.0
      %311 = vmatpush1.msra.mxu0 0.0
      %312 = vmatprep.subr.mxu0 0.0
      %313 = vmatpush1.msra.mxu0 0.0
      %314 = vmatprep.subr.mxu0 0.0
      %315 = vmatpush1.msra.mxu0 0.0
      %316 = vmatprep.subr.mxu0 0.0
      %317 = vmatpush1.msra.mxu0 0.0
      %318 = vmatprep.subr.mxu0 0.0
      %319 = vmatpush1.msra.mxu0 0.0
      %320 = vmatprep.subr.mxu0 0.0
      %321 = vmatpush1.msra.mxu0 0.0
      %322 = vmatprep.subr.mxu0 0.0
      %323 = vmatpush1.msra.mxu0 0.0
      %324 = vmatprep.subr.mxu0 0.0
      %325 = vmatpush1.msra.mxu0 0.0
      %326 = vmatprep.subr.mxu0 0.0
      %327 = vmatpush1.msra.mxu0 0.0
      %328 = vmatprep.subr.mxu0 0.0
      %329 = vmatpush1.msra.mxu0 0.0
      %330 = vmatprep.subr.mxu0 0.0
      %331 = vmatpush1.msra.mxu0 0.0
      %332 = vmatprep.subr.mxu0 0.0
      %333 = vmatpush1.msra.mxu0 0.0
      %334 = vmatprep.subr.mxu0 0.0
      %335 = vmatpush1.msra.mxu0 0.0
      %336 = vmatprep.subr.mxu0 0.0
      %337 = vmatpush1.msra.mxu0 0.0
      %338 = vmatprep.subr.mxu0 0.0
      %339 = vmatpush1.msra.mxu0 0.0
      %340 = vmatprep.subr.mxu0 0.0
      %341 = vmatpush1.msra.mxu0 0.0
      %342 = vmatprep.subr.mxu0 0.0
      %343 = vmatpush1.msra.mxu0 0.0
      %344 = vmatprep.subr.mxu0 0.0
      %345 = vmatpush1.msra.mxu0 0.0
      %346 = vmatprep.subr.mxu0 0.0
      %347 = vmatpush1.msra.mxu0 0.0
      %348 = vmatprep.subr.mxu0 0.0
      %349 = vmatpush1.msra.mxu0 0.0
      %350 = vmatprep.mubr.f32.mxu0 0.0
      %351 = vmatmul.mubr.f32.gmra.mrb[0].mxu0 %v284
      %v352 = vpop.f32.mrb[0].mxu0
      %v353 = vadd.f32 0.0, %v352
      %v354 = vpop.f32.mrb[0].mxu0
      %355 = vdwg.mxu0
      %v356 = vmax.f32 %v353, 0.0
      %vm357 = vcmask 31744
      %v359 = vsel %vm357, %v356, 0
      %vm361 = vcmask 1043456
      %v363 = vsel %vm361, %v281, 0
      %365 = vmatprep.subr.mxu0 0.0
      %366 = vmatpush1.msra.mxu0 %v363
      %367 = vmatprep.subr.mxu0 0.0
      %368 = vmatpush1.msra.mxu0 0.0
      %369 = vmatprep.subr.mxu0 0.0
      %370 = vmatpush1.msra.mxu0 0.0
      %371 = vmatprep.subr.mxu0 0.0
      %372 = vmatpush1.msra.mxu0 0.0
      %373 = vmatprep.subr.mxu0 0.0
      %374 = vmatpush1.msra.mxu0 0.0
      %375 = vmatprep.subr.mxu0 0.0
      %376 = vmatpush1.msra.mxu0 0.0
      %377 = vmatprep.subr.mxu0 0.0
      %378 = vmatpush1.msra.mxu0 0.0
      %379 = vmatprep.subr.mxu0 0.0
      %380 = vmatpush1.msra.mxu0 0.0
      %381 = vmatprep.subr.mxu0 0.0
      %382 = vmatpush1.msra.mxu0 0.0
      %383 = vmatprep.subr.mxu0 0.0
      %384 = vmatpush1.msra.mxu0 0.0
      %385 = vmatprep.subr.mxu0 0.0
      %386 = vmatpush1.msra.mxu0 0.0
      %387 = vmatprep.subr.mxu0 0.0
      %388 = vmatpush1.msra.mxu0 0.0
      %389 = vmatprep.subr.mxu0 0.0
      %390 = vmatpush1.msra.mxu0 0.0
      %391 = vmatprep.subr.mxu0 0.0
      %392 = vmatpush1.msra.mxu0 0.0
      %393 = vmatprep.subr.mxu0 0.0
      %394 = vmatpush1.msra.mxu0 0.0
      %395 = vmatprep.subr.mxu0 0.0
      %396 = vmatpush1.msra.mxu0 0.0
      %397 = vmatprep.subr.mxu0 0.0
      %398 = vmatpush1.msra.mxu0 0.0
      %399 = vmatprep.subr.mxu0 0.0
      %400 = vmatpush1.msra.mxu0 0.0
      %401 = vmatprep.subr.mxu0 0.0
      %402 = vmatpush1.msra.mxu0 0.0
      %403 = vmatprep.subr.mxu0 0.0
      %404 = vmatpush1.msra.mxu0 0.0
      %405 = vmatprep.subr.mxu0 0.0
      %406 = vmatpush1.msra.mxu0 0.0
      %407 = vmatprep.subr.mxu0 0.0
      %408 = vmatpush1.msra.mxu0 0.0
      %409 = vmatprep.subr.mxu0 0.0
      %410 = vmatpush1.msra.mxu0 0.0
      %411 = vmatprep.subr.mxu0 0.0
      %412 = vmatpush1.msra.mxu0 0.0
      %413 = vmatprep.subr.mxu0 0.0
      %414 = vmatpush1.msra.mxu0 0.0
      %415 = vmatprep.subr.mxu0 0.0
      %416 = vmatpush1.msra.mxu0 0.0
      %417 = vmatprep.subr.mxu0 0.0
      %418 = vmatpush1.msra.mxu0 0.0
      %419 = vmatprep.subr.mxu0 0.0
      %420 = vmatpush1.msra.mxu0 0.0
      %421 = vmatprep.subr.mxu0 0.0
      %422 = vmatpush1.msra.mxu0 0.0
      %423 = vmatprep.subr.mxu0 0.0
      %424 = vmatpush1.msra.mxu0 0.0
      %425 = vmatprep.subr.mxu0 0.0
      %426 = vmatpush1.msra.mxu0 0.0
      %427 = vmatprep.subr.mxu0 0.0
      %428 = vmatpush1.msra.mxu0 0.0
      %429 = vmatprep.mubr.f32.mxu0 0.0
      %430 = vmatmul.mubr.f32.gmra.mrb[0].mxu0 %v359
      %v431 = vpop.f32.mrb[0].mxu0
      %v432 = vadd.f32 0.0, %v431
      %v433 = vpop.f32.mrb[0].mxu0
      %434 = vdwg.mxu0
      %v436 = vrot.slane %v432, 2
      %v438 = vadd.f32 %v432, %v436
      %v439 = vxor.u32 %v438, 2147483648
      %v440 = vmul.f32 %v439, 1.442695
      %v441 = vpow.pop %v440
      %v442 = vadd.f32 %v441, 1.0
      %v443 = vrcp.pop %v442
      %v444 = vmul.f32 1.0, %v443
      %445 = vst.msk [vmem:[#allocation5] sm:$0x3] %vm225, %v444
    $region21: #{tpu_custom_call.1} parent=1 // pred_fallthru
      _
    // Predicated region
    $region22: #{tpu_custom_call.1} parent=1 // pred_check
      _
    $region23: #{tpu_custom_call.1} parent=1 // pred_check_branch
      %447 = sbr.rel (0) target = $region25
    $region24: #{tpu_custom_call.1} parent=1 // pred_region
      %s449 = ssub.s32 32, 32
      %450 = vsyncadd [#allocation6], %s449
      %s452 = sshll.u32 [#allocation5], 4
      %s453 = int_to_ptr.vmem [resolvable:$true] %s452
      %455 = dma.vmem_to_hbm [thread:$0]  %s453, 32, %s3, [#allocation6]
    $region25: #{tpu_custom_call.1} parent=1 // pred_fallthru
      _
    // Predicated region
    $region26: #{tpu_custom_call.1} parent=1 // pred_check
      _
    $region27: #{tpu_custom_call.1} parent=1 // pred_check_branch
      %457 = sbr.rel (0) target = $region29
    $region28: #{tpu_custom_call.1} parent=1 // pred_region
      %458 = dma.done [#allocation6], 32
    $region29: #{tpu_custom_call.1} parent=1 // pred_fallthru
      _
    %459 = vsyncpa [#allocation6], 1

</llo_original>
